<compile_context>
chip_gen: v6e
topology: v6e:2x2x1
jax: 0.10.0
libtpu: 0.0.40
codegen_flags: <defaults>
</compile_context>

<pallas_src>
import math

import jax
import jax.numpy as jnp
from jax.experimental import pallas as pl
from jax.experimental.pallas import tpu as pltpu


_VMEM_STEP_BUDGET = 24 * 1024 * 1024   # per-grid-step footprint target (fits v7x 64 MiB VMEM)
_VMEM_LIMIT_BYTES = 48 * 1024 * 1024   # scoped VMEM limit with headroom on all generations


# ----------------------------------------------------------------------------
# Kernel: pure elementwise add; pe tile broadcasts over any leading block dims.
#   main path:      x_ref/o_ref [block_seq, D]      pe_ref [block_seq, D]
#   flattened path: x_ref/o_ref [B, block_cols]     pe_ref [1, block_cols]
# ----------------------------------------------------------------------------
def _pe_add_kernel(x_ref, pe_ref, o_ref):
    o_ref[...] = x_ref[...] + pe_ref[...]


# ----------------------------------------------------------------------------
# pe buffer construction (mirrors PositionalEncoding.__init__); precompute in
# the model dtype at init so the forward pass never re-casts it.
# ----------------------------------------------------------------------------
def make_positional_encoding(hidden_dim: int, max_len: int = 5000,
                             dtype=jnp.float32) -> jnp.ndarray:
    position = jnp.arange(max_len, dtype=jnp.float32)[:, None]               # [L, 1]
    div_term = jnp.exp(
        jnp.arange(0, hidden_dim, 2, dtype=jnp.float32)
        * (-math.log(10000.0) / hidden_dim))                                 # [D/2]
    angles = position * div_term                                             # [L, D/2]
    pe = jnp.zeros((max_len, hidden_dim), jnp.float32)
    pe = pe.at[:, 0::2].set(jnp.sin(angles))
    pe = pe.at[:, 1::2].set(jnp.cos(angles))
    return pe.astype(dtype)                                                  # [L, D]


def _pick_block_seq(seq_len: int, hidden_dim: int, itemsize: int) -> int:
    # Per-step VMEM footprint ~ 2 (double buffer) * (x + out + pe) blocks
    #                         = 6 * block_seq * D * itemsize.
    max_rows = max(8, _VMEM_STEP_BUDGET // (6 * hidden_dim * itemsize))
    max_rows = min(max_rows, seq_len)
    cand = (max_rows // 8) * 8
    while cand >= 8:
        if seq_len % cand == 0:
            return cand
        cand -= 8
    return 8  # unreachable when seq_len % 8 == 0 (caller guarantees)


# ----------------------------------------------------------------------------
# Main path: D % 128 == 0 and S % 8 == 0.
# grid = (n_seq_tiles, B) with batch INNERMOST so the pe tile stays resident.
# ----------------------------------------------------------------------------
def _forward_tiled(x: jnp.ndarray, pe: jnp.ndarray) -> jnp.ndarray:
    B, S, D = x.shape
    block_seq = _pick_block_seq(S, D, x.dtype.itemsize)
    n_seq_tiles = S // block_seq

    # Leading batch dim squeezed out of the kernel view.
    x_spec = pl.BlockSpec((None, block_seq, D), lambda s, b: (b, s, 0))
    # Full pe table passed in; index_map only ever touches the first S rows.
    pe_spec = pl.BlockSpec((block_seq, D), lambda s, b: (s, 0))

    return pl.pallas_call(
        _pe_add_kernel,
        out_shape=jax.ShapeDtypeStruct((B, S, D), x.dtype),
        grid=(n_seq_tiles, B),                      # batch innermost
        in_specs=[x_spec, pe_spec],
        out_specs=x_spec,
        compiler_params=pltpu.CompilerParams(
            dimension_semantics=("parallel", "parallel"),
            vmem_limit_bytes=_VMEM_LIMIT_BYTES),
    )(x, pe)


# ----------------------------------------------------------------------------
# Fallback path for small / awkward D (or S not a multiple of 8): flatten the
# trailing (S, D) dims into one lane-dense column axis, padding to a multiple
# of 128 if needed, so stores are full-width rather than masked.
# ----------------------------------------------------------------------------
def _forward_flat(x: jnp.ndarray, pe: jnp.ndarray) -> jnp.ndarray:
    B, S, D = x.shape
    C = S * D
    Cp = ((C + 127) // 128) * 128

    x2 = x.reshape(B, C)
    pe2 = pe[:S, :].reshape(1, C)
    if Cp != C:
        x2 = jnp.pad(x2, ((0, 0), (0, Cp - C)))
        pe2 = jnp.pad(pe2, ((0, 0), (0, Cp - C)))

    itemsize = x.dtype.itemsize
    # Per step: 2 * (B*cols (x) + B*cols (out) + 1*cols (pe)) * itemsize.
    max_cols = max(128, _VMEM_STEP_BUDGET // (2 * (2 * B + 1) * itemsize))
    max_cols = min(max_cols, Cp)
    block_cols = 128
    cand = (max_cols // 128) * 128
    while cand >= 128:
        if Cp % cand == 0:
            block_cols = cand
            break
        cand -= 128
    n_col_tiles = Cp // block_cols

    x_spec = pl.BlockSpec((B, block_cols), lambda c: (0, c))
    pe_spec = pl.BlockSpec((1, block_cols), lambda c: (0, c))

    out2 = pl.pallas_call(
        _pe_add_kernel,
        out_shape=jax.ShapeDtypeStruct((B, Cp), x.dtype),
        grid=(n_col_tiles,),
        in_specs=[x_spec, pe_spec],
        out_specs=x_spec,
        compiler_params=pltpu.CompilerParams(
            dimension_semantics=("parallel",),
            vmem_limit_bytes=_VMEM_LIMIT_BYTES),
    )(x2, pe2)

    if Cp != C:
        out2 = out2[:, :C]
    return out2.reshape(B, S, D)


# ----------------------------------------------------------------------------
# Wrapper (== PositionalEncoding.forward in eval mode)
# ----------------------------------------------------------------------------
def positional_encoding_pallas(x: jnp.ndarray, pe: jnp.ndarray) -> jnp.ndarray:
    B, S, D = x.shape
    assert pe.shape[0] >= S and pe.shape[1] == D
    if pe.dtype != x.dtype:
        # Note: adds in x.dtype (slightly different from PyTorch's f32 promote).
        pe = pe.astype(x.dtype)
    if D % 128 == 0 and S % 8 == 0:
        return _forward_tiled(x, pe)
    return _forward_flat(x, pe)


# ----------------------------------------------------------------------------
# Pure-JAX reference (mirrors the PyTorch forward in eval mode)
# ----------------------------------------------------------------------------
def positional_encoding_reference(x: jnp.ndarray, pe: jnp.ndarray) -> jnp.ndarray:
    S = x.shape[1]
    return x + pe[None, :S, :].astype(x.dtype)


if __name__ == "__main__":
    # Module-consistent small config (takes the lane-dense flattened path, D=32).
    batch, seq, hidden = 2, 8, 32
    max_len = 5000

    key = jax.random.PRNGKey(0)
    x = jax.random.normal(key, (batch, seq, hidden), jnp.float32)
    pe = make_positional_encoding(hidden, max_len=max_len, dtype=x.dtype)

    out = jax.block_until_ready(positional_encoding_pallas(x, pe))
    ref = positional_encoding_reference(x, pe)
    assert out.shape == (batch, seq, hidden)
    assert jnp.allclose(out, ref, rtol=1e-6, atol=1e-6), (
        f"max abs err = {jnp.max(jnp.abs(out - ref))}")

    # Also exercise the main tiled path (D multiple of 128, S multiple of 8,
    # batch-innermost grid with the pe tile resident).
    x2 = jax.random.normal(jax.random.PRNGKey(0), (2, 16, 128), jnp.float32)
    pe2 = make_positional_encoding(128, max_len=64, dtype=x2.dtype)
    out2 = jax.block_until_ready(positional_encoding_pallas(x2, pe2))
    ref2 = positional_encoding_reference(x2, pe2)
    assert jnp.allclose(out2, ref2, rtol=1e-6, atol=1e-6), (
        f"max abs err = {jnp.max(jnp.abs(out2 - ref2))}")

    print("KERNEL_OK")
</pallas_src>

<mosaic_0001>
module attributes {stable_mosaic.version = 11 : i64} {
  func.func @_pe_add_kernel(%arg0: i32, %arg1: memref<2x256xf32, #tpu.memory_space<vmem>>, %arg2: memref<1x256xf32, #tpu.memory_space<vmem>>, %arg3: memref<2x256xf32, #tpu.memory_space<vmem>>) attributes {dimension_semantics = [#tpu.dimension_semantics<parallel>], iteration_bounds = array<i64: 1>, scalar_prefetch = 0 : i64, scratch_operands = 0 : i64, tpu.core_type = #tpu.core_type<tc>, window_params = [{transform_indices = @transform_0, window_bounds = array<i64: 2, 256>}, {transform_indices = @transform_1, window_bounds = array<i64: 1, 256>}, {transform_indices = @transform_2, window_bounds = array<i64: 2, 256>}]} {
    %c0 = arith.constant 0 : index
    %c0_0 = arith.constant 0 : index
    %0 = vector.load %arg1[%c0, %c0_0] : memref<2x256xf32, #tpu.memory_space<vmem>>, vector<2x256xf32>
    %c0_1 = arith.constant 0 : index
    %c0_2 = arith.constant 0 : index
    %1 = vector.load %arg2[%c0_1, %c0_2] : memref<1x256xf32, #tpu.memory_space<vmem>>, vector<1x256xf32>
    %2 = vector.broadcast %1 : vector<1x256xf32> to vector<2x256xf32>
    %3 = arith.addf %0, %2 : vector<2x256xf32>
    %c0_3 = arith.constant 0 : index
    %c0_4 = arith.constant 0 : index
    %4 = vector.load %arg3[%c0_3, %c0_4] : memref<2x256xf32, #tpu.memory_space<vmem>>, vector<2x256xf32>
    tpu.vector_store %arg3[%c0_3, %c0_4], %3 {strides = array<i32>} : memref<2x256xf32, #tpu.memory_space<vmem>>, vector<2x256xf32>,
    return
  }
  func.func @transform_0(%arg0: i32) -> (i32, i32) {
    %c0_i32 = arith.constant 0 : i32
    %c0_i32_0 = arith.constant 0 : i32
    return %c0_i32, %arg0 : i32, i32
  }
  func.func @transform_1(%arg0: i32) -> (i32, i32) {
    %c0_i32 = arith.constant 0 : i32
    %c0_i32_0 = arith.constant 0 : i32
    return %c0_i32, %arg0 : i32, i32
  }
  func.func @transform_2(%arg0: i32) -> (i32, i32) {
    %c0_i32 = arith.constant 0 : i32
    %c0_i32_0 = arith.constant 0 : i32
    return %c0_i32, %arg0 : i32, i32
  }
}

</mosaic_0001>

<llo_original>
// kernel: tpu_custom_call.1
$region0: #{tpu_custom_call.1}
  #allocation0 [shape = 'u32[]', space=smem, size = 0x4, offset = 0x4, fixed_abs, tag = 'smem constant byte address 0x4 - core index']
  #allocation1 [shape = 'u32[144,128]{1,0:T(1,128)}', space=vmem, size = 0x12000, scoped, tag = 'internal scratch']
  %s0 = inlined_call_operand.hbm [shape: f32[2,256], index: 0, kind: input, shape index: {}]
  %s1 = inlined_call_operand.hbm [shape: f32[1,256], index: 1, kind: input, shape index: {}]
  %s2 = inlined_call_operand.hbm [shape: f32[2,256], index: 2, kind: output, shape index: {}]
  %s3 = sld [smem:[#allocation0]]
  $region26: #{tpu_custom_call.1} parent=0
    _
  %s5 = ssub.s32 1, %s3
  %s6 = scalar_select 0, %s5, %s3
  $region1: #{tpu_custom_call.1} parent=0
    #allocation2 [shape = 'u8[2048]{0}', space=vmem, size = 0x800, scoped, tag = 'input window, operand 0, single buffered']
    #allocation3 [shape = 's32[1]{0}', space=sflag, size = 0x4, scoped, tag = 'scoped memory for tpu_custom_call.1']
    #allocation4 [shape = 's32[1]{0}', space=sflag, size = 0x4, scoped, tag = 'scoped memory for tpu_custom_call.1']
    #allocation5 [shape = 'u8[1024]{0}', space=vmem, size = 0x400, scoped, tag = 'input window, operand 1, single buffered']
    #allocation6 [shape = 's32[1]{0}', space=sflag, size = 0x4, scoped, tag = 'scoped memory for tpu_custom_call.1']
    #allocation7 [shape = 'u8[2048]{0}', space=vmem, size = 0x800, scoped, tag = 'output window, operand 0, single buffered']
    %7 = vsyncpa [#allocation3], 0
    %8 = vsyncpa [#allocation6], 0
    %9 = vsyncpa [#allocation4], 0
    // Predicated region
    $region2: #{tpu_custom_call.1} parent=1 // pred_check
      _
    $region3: #{tpu_custom_call.1} parent=1 // pred_check_branch
      %11 = sbr.rel (0) target = $region5
    $region4: #{tpu_custom_call.1} parent=1 // pred_region
      %s13 = ssub.s32 64, 64
      %14 = vsyncadd [#allocation3], %s13
      %s16 = sshll.u32 [#allocation2], 4
      %s17 = int_to_ptr.vmem [resolvable:$true] %s16
      %19 = dma.hbm_to_vmem [thread:$0]  %s0, 64, %s17, [#allocation3]
    $region5: #{tpu_custom_call.1} parent=1 // pred_fallthru
      _
    // Predicated region
    $region6: #{tpu_custom_call.1} parent=1 // pred_check
      _
    $region7: #{tpu_custom_call.1} parent=1 // pred_check_branch
      %21 = sbr.rel (0) target = $region9
    $region8: #{tpu_custom_call.1} parent=1 // pred_region
      %s23 = ssub.s32 32, 32
      %24 = vsyncadd [#allocation6], %s23
      %s26 = sshll.u32 [#allocation5], 4
      %s27 = int_to_ptr.vmem [resolvable:$true] %s26
      %29 = dma.hbm_to_vmem [thread:$0]  %s1, 32, %s27, [#allocation6]
    $region9: #{tpu_custom_call.1} parent=1 // pred_fallthru
      _
    // Predicated region
    $region10: #{tpu_custom_call.1} parent=1 // pred_check
      _
    $region11: #{tpu_custom_call.1} parent=1 // pred_check_branch
      %31 = sbr.rel (0) target = $region13
    $region12: #{tpu_custom_call.1} parent=1 // pred_region
      %32 = dma.done [#allocation3], 64
    $region13: #{tpu_custom_call.1} parent=1 // pred_fallthru
      _
    // Predicated region
    $region14: #{tpu_custom_call.1} parent=1 // pred_check
      _
    $region15: #{tpu_custom_call.1} parent=1 // pred_check_branch
      %34 = sbr.rel (0) target = $region17
    $region16: #{tpu_custom_call.1} parent=1 // pred_region
      %35 = dma.done [#allocation6], 32
    $region17: #{tpu_custom_call.1} parent=1 // pred_fallthru
      _
    %v36 = vld [vmem:[#allocation2] sm:$0xf]
    %v37 = vld [vmem:[#allocation5] sm:$0x3]
    %v39 = vlaneseq
    %v40 = vshrl.u32 %v39, 7
    %v41 = vsub.s32 0, %v40
    %v42 = vrot.slane %v37, %v41
    %v43 = vlaneseq
    %v44 = vshrl.u32 %v43, 7
    %v45 = vsub.s32 1, %v44
    %v46 = vrot.slane %v37, %v45
    %v47 = vcombine.low %v42, %v46
    %v49 = vunpack.c.l.s4 1983009808
    %v50 = vunpack.c.0.s8 %v49
    %v51 = vlaneseq
    %v52 = vshrl.u32 %v51, 7
    %v53 = vsub.s32 %v50, %v52
    %v54 = vrot.slane %v47, %v53
    %v56 = vadd.f32 %v36, %v54
    %57 = vst [vmem:[#allocation7] sm:$0xf] %v56
    // Predicated region
    $region18: #{tpu_custom_call.1} parent=1 // pred_check
      _
    $region19: #{tpu_custom_call.1} parent=1 // pred_check_branch
      %59 = sbr.rel (0) target = $region21
    $region20: #{tpu_custom_call.1} parent=1 // pred_region
      %s61 = ssub.s32 64, 64
      %62 = vsyncadd [#allocation4], %s61
      %s64 = sshll.u32 [#allocation7], 4
      %s65 = int_to_ptr.vmem [resolvable:$true] %s64
      %67 = dma.vmem_to_hbm [thread:$0]  %s65, 64, %s2, [#allocation4]
    $region21: #{tpu_custom_call.1} parent=1 // pred_fallthru
      _
    // Predicated region
    $region22: #{tpu_custom_call.1} parent=1 // pred_check
      _
    $region23: #{tpu_custom_call.1} parent=1 // pred_check_branch
      %69 = sbr.rel (0) target = $region25
    $region24: #{tpu_custom_call.1} parent=1 // pred_region
      %70 = dma.done [#allocation4], 64
    $region25: #{tpu_custom_call.1} parent=1 // pred_fallthru
      _
    %71 = vsyncpa [#allocation3], 1
    %72 = vsyncpa [#allocation6], 1
    %73 = vsyncpa [#allocation4], 1

</llo_original>
